<compile_context>
chip_gen: v6e
topology: v6e:2x2x1
jax: 0.10.0
libtpu: 0.0.40
codegen_flags: <defaults>
</compile_context>

<pallas_src>
import jax
import jax.numpy as jnp
from jax.experimental import pallas as pl
from jax.experimental.pallas import tpu as pltpu


def _seq_gen_kernel(x_ref, w_in_ref, b_ref, w_ra_ref, states_ref, actions_ref):
    """Full T-step recurrence for one node tile.

    x_ref:       [tn, H]     node representations (tile)
    w_in_ref:    [H, H]      input projection
    b_ref:       [1, H]      bias
    w_ra_ref:    [H, H+A]    fused [W_rec | W_act]
    states_ref:  [tn, T*H]   lane-dense node states (step t -> lanes [t*H,(t+1)*H))
    actions_ref: [tn, T]     int32 argmax actions
    """
    n, h = x_ref.shape
    a = w_ra_ref.shape[1] - h
    t_steps = actions_ref.shape[1]

    # Hoisted loads: each VMEM operand is read exactly once for the whole
    # unrolled recurrence.
    x = x_ref[...]
    w_in = w_in_ref[...]
    b = b_ref[...]
    w_ra = w_ra_ref[...]

    # Step-invariant input projection + bias: one MXU matmul + one broadcast
    # for the whole kernel.
    xwb = jnp.dot(x, w_in, preferred_element_type=jnp.float32) + b
    # Hoisted lane-index iota for the in-kernel argmax (JAX doesn't CSE
    # broadcast_in_dim across the unrolled iterations).
    lane_idx = jax.lax.broadcasted_iota(jnp.int32, (n, a), 1)

    rec = jnp.zeros((n, h), jnp.float32)  # state_{t-1} @ W_rec, starts at zero
    # T is small and static: fully unrolled loop (static indices -> static
    # lane-offset stores; equivalent to lax.fori_loop(..., unroll=True)).
    for t in range(t_steps):
        new_state = jnp.tanh(xwb + rec)
        # Single fused MXU matmul per step: [tn, H] @ [H, H+A].
        sa = jnp.dot(new_state, w_ra, preferred_element_type=jnp.float32)
        rec = sa[:, :h]          # recurrent term for the next step
        logits = sa[:, h:]       # action logits for this step

        # Lane-dense per-step state write (static lane offset t*H) into the
        # VMEM output block; the HBM write-back is one dense DMA per tile.
        states_ref[:, t * h:(t + 1) * h] = new_state

        # In-kernel argmax over the action axis (XLU reduces); lowest index
        # wins ties, matching jnp.argmax.
        row_max = jnp.max(logits, axis=-1, keepdims=True)
        cand = jnp.where(logits == row_max, lane_idx, a)
        actions_ref[:, t:t + 1] = jnp.min(cand, axis=-1, keepdims=True)


def sequential_generator_forward(node_repr, w_in, w_rec, b, w_act, num_steps):
    """Pallas-backed forward pass.

    Returns (node_states [T, N, H], actions [T, N] int32, delta_edges [T*N, 2]).
    """
    n, h = node_repr.shape
    a = w_act.shape[1]

    # Fuse the recurrent and action weight matrices so each decode step is a
    # single MXU matmul inside the kernel.
    w_ra = jnp.concatenate([w_rec, w_act], axis=1)  # [H, H+A]

    # Node-tile size: the recurrence is independent per node, so nodes are
    # tiled along a "parallel" grid axis.  Pick the largest clean divisor of N
    # (sublane-aligned); fall back to a single whole-array block.
    tn = n
    for cand in (512, 256, 128, 64, 32, 16, 8):
        if n % cand == 0:
            tn = cand
            break
    grid = (n // tn,)

    states_nh, actions_nt = pl.pallas_call(
        _seq_gen_kernel,
        out_shape=(
            jax.ShapeDtypeStruct((n, num_steps * h), jnp.float32),  # lane-dense states
            jax.ShapeDtypeStruct((n, num_steps), jnp.int32),        # actions
        ),
        grid=grid,
        in_specs=[
            pl.BlockSpec((tn, h), lambda i: (i, 0)),          # node tile
            pl.BlockSpec((h, h), lambda i: (0, 0)),           # W_in   (resident)
            pl.BlockSpec((1, h), lambda i: (0, 0)),           # bias   (resident)
            pl.BlockSpec((h, h + a), lambda i: (0, 0)),       # [W_rec | W_act]
        ],
        out_specs=(
            pl.BlockSpec((tn, num_steps * h), lambda i: (i, 0)),
            pl.BlockSpec((tn, num_steps), lambda i: (i, 0)),
        ),
        compiler_params=pltpu.CompilerParams(
            dimension_semantics=("parallel",)
        ),
    )(node_repr, w_in, b, w_ra)

    # Layout plumbing back to the module's [T, N, H] / [T, N] views.
    states = states_nh.reshape(n, num_steps, h).transpose(1, 0, 2)
    actions = actions_nt.T

    # Glue: "delta graph" as an edge list (node i --action--> action-id node).
    node_ids = jnp.broadcast_to(jnp.arange(n, dtype=jnp.int32), (num_steps, n))
    delta_edges = jnp.stack([node_ids.reshape(-1), actions.reshape(-1)], axis=-1)

    return states, actions, delta_edges


def _reference_forward(node_repr, w_in, w_rec, b, w_act, num_steps):
    """Pure-JAX reference for correctness checking."""
    n, h = node_repr.shape
    state = jnp.zeros((n, h), jnp.float32)
    states, logits = [], []
    for _ in range(num_steps):
        state = jnp.tanh(node_repr @ w_in + state @ w_rec + b)
        states.append(state)
        logits.append(state @ w_act)
    return jnp.stack(states, 0), jnp.stack(logits, 0)


if __name__ == "__main__":
    key = jax.random.PRNGKey(0)
    k1, k2, k3, k4, k5 = jax.random.split(key, 5)

    N_NODES = 8      # graph nodes at this time step
    HIDDEN = 32      # node representation width
    N_ACTIONS = 16   # action vocabulary
    T_STEPS = 8      # sequential decoding steps ("node_name_at_time" length)

    node_repr = jax.random.normal(k1, (N_NODES, HIDDEN), jnp.float32)
    w_in = jax.random.normal(k2, (HIDDEN, HIDDEN), jnp.float32) * 0.1
    w_rec = jax.random.normal(k3, (HIDDEN, HIDDEN), jnp.float32) * 0.1
    b = jax.random.normal(k4, (1, HIDDEN), jnp.float32) * 0.1
    w_act = jax.random.normal(k5, (HIDDEN, N_ACTIONS), jnp.float32) * 0.1

    states, actions, delta_edges = sequential_generator_forward(
        node_repr, w_in, w_rec, b, w_act, T_STEPS
    )
    jax.block_until_ready((states, actions, delta_edges))

    # Correctness check against pure-JAX reference.
    ref_states, ref_logits = _reference_forward(
        node_repr, w_in, w_rec, b, w_act, T_STEPS
    )
    ref_actions = jnp.argmax(ref_logits, axis=-1).astype(jnp.int32)
    assert jnp.allclose(states, ref_states, atol=1e-5, rtol=1e-5)
    assert jnp.array_equal(actions, ref_actions)

    print("KERNEL_OK")
</pallas_src>

<mosaic_0001>
module attributes {stable_mosaic.version = 11 : i64} {
  func.func @_seq_gen_kernel(%arg0: i32, %arg1: memref<8x32xf32, #tpu.memory_space<vmem>>, %arg2: memref<32x32xf32, #tpu.memory_space<vmem>>, %arg3: memref<1x32xf32, #tpu.memory_space<vmem>>, %arg4: memref<32x48xf32, #tpu.memory_space<vmem>>, %arg5: memref<8x256xf32, #tpu.memory_space<vmem>>, %arg6: memref<8x8xi32, #tpu.memory_space<vmem>>) attributes {dimension_semantics = [#tpu.dimension_semantics<parallel>], iteration_bounds = array<i64: 1>, scalar_prefetch = 0 : i64, scratch_operands = 0 : i64, tpu.core_type = #tpu.core_type<tc>, window_params = [{transform_indices = @transform_0, window_bounds = array<i64: 8, 32>}, {pipeline_mode = #tpu.pipeline_mode<synchronous>, transform_indices = @transform_1, window_bounds = array<i64: 32, 32>}, {pipeline_mode = #tpu.pipeline_mode<synchronous>, transform_indices = @transform_2, window_bounds = array<i64: 1, 32>}, {pipeline_mode = #tpu.pipeline_mode<synchronous>, transform_indices = @transform_3, window_bounds = array<i64: 32, 48>}, {transform_indices = @transform_4, window_bounds = array<i64: 8, 256>}, {transform_indices = @transform_5, window_bounds = array<i64: 8, 8>}]} {
    %c0 = arith.constant 0 : index
    %c0_0 = arith.constant 0 : index
    %0 = vector.load %arg1[%c0, %c0_0] : memref<8x32xf32, #tpu.memory_space<vmem>>, vector<8x32xf32>
    %c0_1 = arith.constant 0 : index
    %c0_2 = arith.constant 0 : index
    %1 = vector.load %arg2[%c0_1, %c0_2] : memref<32x32xf32, #tpu.memory_space<vmem>>, vector<32x32xf32>
    %c0_3 = arith.constant 0 : index
    %c0_4 = arith.constant 0 : index
    %2 = vector.load %arg3[%c0_3, %c0_4] : memref<1x32xf32, #tpu.memory_space<vmem>>, vector<1x32xf32>
    %c0_5 = arith.constant 0 : index
    %c0_6 = arith.constant 0 : index
    %3 = vector.load %arg4[%c0_5, %c0_6] : memref<32x48xf32, #tpu.memory_space<vmem>>, vector<32x48xf32>
    %cst = arith.constant dense<0.000000e+00> : vector<8x32xf32>
    %4 = tpu.matmul %0, %1, %cst {dimension_numbers = #tpu.dot_dimension_numbers<[1], [0], [0], [1], [0, 0, 1, 1], [], []>} : vector<8x32xf32>, vector<32x32xf32>, vector<8x32xf32> -> vector<8x32xf32>
    %5 = vector.broadcast %2 : vector<1x32xf32> to vector<8x32xf32>
    %6 = arith.addf %4, %5 : vector<8x32xf32>
    %7 = tpu.iota {dimensions = array<i32: 1>} : vector<8x16xi32>
    %cst_7 = arith.constant 0.000000e+00 : f32
    %8 = vector.broadcast %cst_7 : f32 to vector<8x32xf32>
    %9 = arith.addf %6, %8 : vector<8x32xf32>
    %10 = math.tanh %9 : vector<8x32xf32>
    %cst_8 = arith.constant dense<0.000000e+00> : vector<8x48xf32>
    %11 = tpu.matmul %10, %3, %cst_8 {dimension_numbers = #tpu.dot_dimension_numbers<[1], [0], [0], [1], [0, 0, 1, 1], [], []>} : vector<8x32xf32>, vector<32x48xf32>, vector<8x48xf32> -> vector<8x48xf32>
    %12 = vector.extract_strided_slice %11 {offsets = [0, 0], sizes = [8, 32], strides = [1, 1]} : vector<8x48xf32> to vector<8x32xf32>
    %13 = vector.extract_strided_slice %11 {offsets = [0, 32], sizes = [8, 16], strides = [1, 1]} : vector<8x48xf32> to vector<8x16xf32>
    %c0_9 = arith.constant 0 : index
    %c0_10 = arith.constant 0 : index
    %14 = vector.load %arg5[%c0_9, %c0_10] : memref<8x256xf32, #tpu.memory_space<vmem>>, vector<8x32xf32>
    tpu.vector_store %arg5[%c0_9, %c0_10], %10 {strides = array<i32>} : memref<8x256xf32, #tpu.memory_space<vmem>>, vector<8x32xf32>,
    %cst_11 = arith.constant dense<0xFF800000> : vector<8xf32>
    %15 = vector.multi_reduction <maximumf>, %13, %cst_11 [1] : vector<8x16xf32> to vector<8xf32>
    %16 = vector.shape_cast %15 : vector<8xf32> to vector<8x1xf32>
    %17 = vector.broadcast %16 : vector<8x1xf32> to vector<8x16xf32>
    %18 = arith.cmpf oeq, %13, %17 : vector<8x16xf32>
    %c16_i32 = arith.constant 16 : i32
    %19 = vector.broadcast %c16_i32 : i32 to vector<8x16xi32>
    %20 = arith.select %18, %7, %19 : vector<8x16xi1>, vector<8x16xi32>
    %cst_12 = arith.constant dense<2147483647> : vector<8xi32>
    %21 = vector.multi_reduction <minsi>, %20, %cst_12 [1] : vector<8x16xi32> to vector<8xi32>
    %22 = vector.shape_cast %21 : vector<8xi32> to vector<8x1xi32>
    %c0_13 = arith.constant 0 : index
    %c0_14 = arith.constant 0 : index
    %23 = vector.load %arg6[%c0_13, %c0_14] : memref<8x8xi32, #tpu.memory_space<vmem>>, vector<8x1xi32>
    tpu.vector_store %arg6[%c0_13, %c0_14], %22 {strides = array<i32>} : memref<8x8xi32, #tpu.memory_space<vmem>>, vector<8x1xi32>,
    %24 = arith.addf %6, %12 : vector<8x32xf32>
    %25 = math.tanh %24 : vector<8x32xf32>
    %cst_15 = arith.constant dense<0.000000e+00> : vector<8x48xf32>
    %26 = tpu.matmul %25, %3, %cst_15 {dimension_numbers = #tpu.dot_dimension_numbers<[1], [0], [0], [1], [0, 0, 1, 1], [], []>} : vector<8x32xf32>, vector<32x48xf32>, vector<8x48xf32> -> vector<8x48xf32>
    %27 = vector.extract_strided_slice %26 {offsets = [0, 0], sizes = [8, 32], strides = [1, 1]} : vector<8x48xf32> to vector<8x32xf32>
    %28 = vector.extract_strided_slice %26 {offsets = [0, 32], sizes = [8, 16], strides = [1, 1]} : vector<8x48xf32> to vector<8x16xf32>
    %c0_16 = arith.constant 0 : index
    %c32 = arith.constant 32 : index
    %29 = vector.load %arg5[%c0_16, %c32] : memref<8x256xf32, #tpu.memory_space<vmem>>, vector<8x32xf32>
    tpu.vector_store %arg5[%c0_16, %c32], %25 {strides = array<i32>} : memref<8x256xf32, #tpu.memory_space<vmem>>, vector<8x32xf32>,
    %cst_17 = arith.constant dense<0xFF800000> : vector<8xf32>
    %30 = vector.multi_reduction <maximumf>, %28, %cst_17 [1] : vector<8x16xf32> to vector<8xf32>
    %31 = vector.shape_cast %30 : vector<8xf32> to vector<8x1xf32>
    %32 = vector.broadcast %31 : vector<8x1xf32> to vector<8x16xf32>
    %33 = arith.cmpf oeq, %28, %32 : vector<8x16xf32>
    %c16_i32_18 = arith.constant 16 : i32
    %34 = vector.broadcast %c16_i32_18 : i32 to vector<8x16xi32>
    %35 = arith.select %33, %7, %34 : vector<8x16xi1>, vector<8x16xi32>
    %cst_19 = arith.constant dense<2147483647> : vector<8xi32>
    %36 = vector.multi_reduction <minsi>, %35, %cst_19 [1] : vector<8x16xi32> to vector<8xi32>
    %37 = vector.shape_cast %36 : vector<8xi32> to vector<8x1xi32>
    %c0_20 = arith.constant 0 : index
    %c1 = arith.constant 1 : index
    %38 = vector.load %arg6[%c0_20, %c1] : memref<8x8xi32, #tpu.memory_space<vmem>>, vector<8x1xi32>
    tpu.vector_store %arg6[%c0_20, %c1], %37 {strides = array<i32>} : memref<8x8xi32, #tpu.memory_space<vmem>>, vector<8x1xi32>,
    %39 = arith.addf %6, %27 : vector<8x32xf32>
    %40 = math.tanh %39 : vector<8x32xf32>
    %cst_21 = arith.constant dense<0.000000e+00> : vector<8x48xf32>
    %41 = tpu.matmul %40, %3, %cst_21 {dimension_numbers = #tpu.dot_dimension_numbers<[1], [0], [0], [1], [0, 0, 1, 1], [], []>} : vector<8x32xf32>, vector<32x48xf32>, vector<8x48xf32> -> vector<8x48xf32>
    %42 = vector.extract_strided_slice %41 {offsets = [0, 0], sizes = [8, 32], strides = [1, 1]} : vector<8x48xf32> to vector<8x32xf32>
    %43 = vector.extract_strided_slice %41 {offsets = [0, 32], sizes = [8, 16], strides = [1, 1]} : vector<8x48xf32> to vector<8x16xf32>
    %c0_22 = arith.constant 0 : index
    %c64 = arith.constant 64 : index
    %44 = vector.load %arg5[%c0_22, %c64] : memref<8x256xf32, #tpu.memory_space<vmem>>, vector<8x32xf32>
    tpu.vector_store %arg5[%c0_22, %c64], %40 {strides = array<i32>} : memref<8x256xf32, #tpu.memory_space<vmem>>, vector<8x32xf32>,
    %cst_23 = arith.constant dense<0xFF800000> : vector<8xf32>
    %45 = vector.multi_reduction <maximumf>, %43, %cst_23 [1] : vector<8x16xf32> to vector<8xf32>
    %46 = vector.shape_cast %45 : vector<8xf32> to vector<8x1xf32>
    %47 = vector.broadcast %46 : vector<8x1xf32> to vector<8x16xf32>
    %48 = arith.cmpf oeq, %43, %47 : vector<8x16xf32>
    %c16_i32_24 = arith.constant 16 : i32
    %49 = vector.broadcast %c16_i32_24 : i32 to vector<8x16xi32>
    %50 = arith.select %48, %7, %49 : vector<8x16xi1>, vector<8x16xi32>
    %cst_25 = arith.constant dense<2147483647> : vector<8xi32>
    %51 = vector.multi_reduction <minsi>, %50, %cst_25 [1] : vector<8x16xi32> to vector<8xi32>
    %52 = vector.shape_cast %51 : vector<8xi32> to vector<8x1xi32>
    %c0_26 = arith.constant 0 : index
    %c2 = arith.constant 2 : index
    %53 = vector.load %arg6[%c0_26, %c2] : memref<8x8xi32, #tpu.memory_space<vmem>>, vector<8x1xi32>
    tpu.vector_store %arg6[%c0_26, %c2], %52 {strides = array<i32>} : memref<8x8xi32, #tpu.memory_space<vmem>>, vector<8x1xi32>,
    %54 = arith.addf %6, %42 : vector<8x32xf32>
    %55 = math.tanh %54 : vector<8x32xf32>
    %cst_27 = arith.constant dense<0.000000e+00> : vector<8x48xf32>
    %56 = tpu.matmul %55, %3, %cst_27 {dimension_numbers = #tpu.dot_dimension_numbers<[1], [0], [0], [1], [0, 0, 1, 1], [], []>} : vector<8x32xf32>, vector<32x48xf32>, vector<8x48xf32> -> vector<8x48xf32>
    %57 = vector.extract_strided_slice %56 {offsets = [0, 0], sizes = [8, 32], strides = [1, 1]} : vector<8x48xf32> to vector<8x32xf32>
    %58 = vector.extract_strided_slice %56 {offsets = [0, 32], sizes = [8, 16], strides = [1, 1]} : vector<8x48xf32> to vector<8x16xf32>
    %c0_28 = arith.constant 0 : index
    %c96 = arith.constant 96 : index
    %59 = vector.load %arg5[%c0_28, %c96] : memref<8x256xf32, #tpu.memory_space<vmem>>, vector<8x32xf32>
    tpu.vector_store %arg5[%c0_28, %c96], %55 {strides = array<i32>} : memref<8x256xf32, #tpu.memory_space<vmem>>, vector<8x32xf32>,
    %cst_29 = arith.constant dense<0xFF800000> : vector<8xf32>
    %60 = vector.multi_reduction <maximumf>, %58, %cst_29 [1] : vector<8x16xf32> to vector<8xf32>
    %61 = vector.shape_cast %60 : vector<8xf32> to vector<8x1xf32>
    %62 = vector.broadcast %61 : vector<8x1xf32> to vector<8x16xf32>
    %63 = arith.cmpf oeq, %58, %62 : vector<8x16xf32>
    %c16_i32_30 = arith.constant 16 : i32
    %64 = vector.broadcast %c16_i32_30 : i32 to vector<8x16xi32>
    %65 = arith.select %63, %7, %64 : vector<8x16xi1>, vector<8x16xi32>
    %cst_31 = arith.constant dense<2147483647> : vector<8xi32>
    %66 = vector.multi_reduction <minsi>, %65, %cst_31 [1] : vector<8x16xi32> to vector<8xi32>
    %67 = vector.shape_cast %66 : vector<8xi32> to vector<8x1xi32>
    %c0_32 = arith.constant 0 : index
    %c3 = arith.constant 3 : index
    %68 = vector.load %arg6[%c0_32, %c3] : memref<8x8xi32, #tpu.memory_space<vmem>>, vector<8x1xi32>
    tpu.vector_store %arg6[%c0_32, %c3], %67 {strides = array<i32>} : memref<8x8xi32, #tpu.memory_space<vmem>>, vector<8x1xi32>,
    %69 = arith.addf %6, %57 : vector<8x32xf32>
    %70 = math.tanh %69 : vector<8x32xf32>
    %cst_33 = arith.constant dense<0.000000e+00> : vector<8x48xf32>
    %71 = tpu.matmul %70, %3, %cst_33 {dimension_numbers = #tpu.dot_dimension_numbers<[1], [0], [0], [1], [0, 0, 1, 1], [], []>} : vector<8x32xf32>, vector<32x48xf32>, vector<8x48xf32> -> vector<8x48xf32>
    %72 = vector.extract_strided_slice %71 {offsets = [0, 0], sizes = [8, 32], strides = [1, 1]} : vector<8x48xf32> to vector<8x32xf32>
    %73 = vector.extract_strided_slice %71 {offsets = [0, 32], sizes = [8, 16], strides = [1, 1]} : vector<8x48xf32> to vector<8x16xf32>
    %c0_34 = arith.constant 0 : index
    %c128 = arith.constant 128 : index
    %74 = vector.load %arg5[%c0_34, %c128] : memref<8x256xf32, #tpu.memory_space<vmem>>, vector<8x32xf32>
    tpu.vector_store %arg5[%c0_34, %c128], %70 {strides = array<i32>} : memref<8x256xf32, #tpu.memory_space<vmem>>, vector<8x32xf32>,
    %cst_35 = arith.constant dense<0xFF800000> : vector<8xf32>
    %75 = vector.multi_reduction <maximumf>, %73, %cst_35 [1] : vector<8x16xf32> to vector<8xf32>
    %76 = vector.shape_cast %75 : vector<8xf32> to vector<8x1xf32>
    %77 = vector.broadcast %76 : vector<8x1xf32> to vector<8x16xf32>
    %78 = arith.cmpf oeq, %73, %77 : vector<8x16xf32>
    %c16_i32_36 = arith.constant 16 : i32
    %79 = vector.broadcast %c16_i32_36 : i32 to vector<8x16xi32>
    %80 = arith.select %78, %7, %79 : vector<8x16xi1>, vector<8x16xi32>
    %cst_37 = arith.constant dense<2147483647> : vector<8xi32>
    %81 = vector.multi_reduction <minsi>, %80, %cst_37 [1] : vector<8x16xi32> to vector<8xi32>
    %82 = vector.shape_cast %81 : vector<8xi32> to vector<8x1xi32>
    %c0_38 = arith.constant 0 : index
    %c4 = arith.constant 4 : index
    %83 = vector.load %arg6[%c0_38, %c4] : memref<8x8xi32, #tpu.memory_space<vmem>>, vector<8x1xi32>
    tpu.vector_store %arg6[%c0_38, %c4], %82 {strides = array<i32>} : memref<8x8xi32, #tpu.memory_space<vmem>>, vector<8x1xi32>,
    %84 = arith.addf %6, %72 : vector<8x32xf32>
    %85 = math.tanh %84 : vector<8x32xf32>
    %cst_39 = arith.constant dense<0.000000e+00> : vector<8x48xf32>
    %86 = tpu.matmul %85, %3, %cst_39 {dimension_numbers = #tpu.dot_dimension_numbers<[1], [0], [0], [1], [0, 0, 1, 1], [], []>} : vector<8x32xf32>, vector<32x48xf32>, vector<8x48xf32> -> vector<8x48xf32>
    %87 = vector.extract_strided_slice %86 {offsets = [0, 0], sizes = [8, 32], strides = [1, 1]} : vector<8x48xf32> to vector<8x32xf32>
    %88 = vector.extract_strided_slice %86 {offsets = [0, 32], sizes = [8, 16], strides = [1, 1]} : vector<8x48xf32> to vector<8x16xf32>
    %c0_40 = arith.constant 0 : index
    %c160 = arith.constant 160 : index
    %89 = vector.load %arg5[%c0_40, %c160] : memref<8x256xf32, #tpu.memory_space<vmem>>, vector<8x32xf32>
    tpu.vector_store %arg5[%c0_40, %c160], %85 {strides = array<i32>} : memref<8x256xf32, #tpu.memory_space<vmem>>, vector<8x32xf32>,
    %cst_41 = arith.constant dense<0xFF800000> : vector<8xf32>
    %90 = vector.multi_reduction <maximumf>, %88, %cst_41 [1] : vector<8x16xf32> to vector<8xf32>
    %91 = vector.shape_cast %90 : vector<8xf32> to vector<8x1xf32>
    %92 = vector.broadcast %91 : vector<8x1xf32> to vector<8x16xf32>
    %93 = arith.cmpf oeq, %88, %92 : vector<8x16xf32>
    %c16_i32_42 = arith.constant 16 : i32
    %94 = vector.broadcast %c16_i32_42 : i32 to vector<8x16xi32>
    %95 = arith.select %93, %7, %94 : vector<8x16xi1>, vector<8x16xi32>
    %cst_43 = arith.constant dense<2147483647> : vector<8xi32>
    %96 = vector.multi_reduction <minsi>, %95, %cst_43 [1] : vector<8x16xi32> to vector<8xi32>
    %97 = vector.shape_cast %96 : vector<8xi32> to vector<8x1xi32>
    %c0_44 = arith.constant 0 : index
    %c5 = arith.constant 5 : index
    %98 = vector.load %arg6[%c0_44, %c5] : memref<8x8xi32, #tpu.memory_space<vmem>>, vector<8x1xi32>
    tpu.vector_store %arg6[%c0_44, %c5], %97 {strides = array<i32>} : memref<8x8xi32, #tpu.memory_space<vmem>>, vector<8x1xi32>,
    %99 = arith.addf %6, %87 : vector<8x32xf32>
    %100 = math.tanh %99 : vector<8x32xf32>
    %cst_45 = arith.constant dense<0.000000e+00> : vector<8x48xf32>
    %101 = tpu.matmul %100, %3, %cst_45 {dimension_numbers = #tpu.dot_dimension_numbers<[1], [0], [0], [1], [0, 0, 1, 1], [], []>} : vector<8x32xf32>, vector<32x48xf32>, vector<8x48xf32> -> vector<8x48xf32>
    %102 = vector.extract_strided_slice %101 {offsets = [0, 0], sizes = [8, 32], strides = [1, 1]} : vector<8x48xf32> to vector<8x32xf32>
    %103 = vector.extract_strided_slice %101 {offsets = [0, 32], sizes = [8, 16], strides = [1, 1]} : vector<8x48xf32> to vector<8x16xf32>
    %c0_46 = arith.constant 0 : index
    %c192 = arith.constant 192 : index
    %104 = vector.load %arg5[%c0_46, %c192] : memref<8x256xf32, #tpu.memory_space<vmem>>, vector<8x32xf32>
    tpu.vector_store %arg5[%c0_46, %c192], %100 {strides = array<i32>} : memref<8x256xf32, #tpu.memory_space<vmem>>, vector<8x32xf32>,
    %cst_47 = arith.constant dense<0xFF800000> : vector<8xf32>
    %105 = vector.multi_reduction <maximumf>, %103, %cst_47 [1] : vector<8x16xf32> to vector<8xf32>
    %106 = vector.shape_cast %105 : vector<8xf32> to vector<8x1xf32>
    %107 = vector.broadcast %106 : vector<8x1xf32> to vector<8x16xf32>
    %108 = arith.cmpf oeq, %103, %107 : vector<8x16xf32>
    %c16_i32_48 = arith.constant 16 : i32
    %109 = vector.broadcast %c16_i32_48 : i32 to vector<8x16xi32>
    %110 = arith.select %108, %7, %109 : vector<8x16xi1>, vector<8x16xi32>
    %cst_49 = arith.constant dense<2147483647> : vector<8xi32>
    %111 = vector.multi_reduction <minsi>, %110, %cst_49 [1] : vector<8x16xi32> to vector<8xi32>
    %112 = vector.shape_cast %111 : vector<8xi32> to vector<8x1xi32>
    %c0_50 = arith.constant 0 : index
    %c6 = arith.constant 6 : index
    %113 = vector.load %arg6[%c0_50, %c6] : memref<8x8xi32, #tpu.memory_space<vmem>>, vector<8x1xi32>
    tpu.vector_store %arg6[%c0_50, %c6], %112 {strides = array<i32>} : memref<8x8xi32, #tpu.memory_space<vmem>>, vector<8x1xi32>,
    %114 = arith.addf %6, %102 : vector<8x32xf32>
    %115 = math.tanh %114 : vector<8x32xf32>
    %cst_51 = arith.constant dense<0.000000e+00> : vector<8x48xf32>
    %116 = tpu.matmul %115, %3, %cst_51 {dimension_numbers = #tpu.dot_dimension_numbers<[1], [0], [0], [1], [0, 0, 1, 1], [], []>} : vector<8x32xf32>, vector<32x48xf32>, vector<8x48xf32> -> vector<8x48xf32>
    %117 = vector.extract_strided_slice %116 {offsets = [0, 32], sizes = [8, 16], strides = [1, 1]} : vector<8x48xf32> to vector<8x16xf32>
    %c0_52 = arith.constant 0 : index
    %c224 = arith.constant 224 : index
    %118 = vector.load %arg5[%c0_52, %c224] : memref<8x256xf32, #tpu.memory_space<vmem>>, vector<8x32xf32>
    tpu.vector_store %arg5[%c0_52, %c224], %115 {strides = array<i32>} : memref<8x256xf32, #tpu.memory_space<vmem>>, vector<8x32xf32>,
    %cst_53 = arith.constant dense<0xFF800000> : vector<8xf32>
    %119 = vector.multi_reduction <maximumf>, %117, %cst_53 [1] : vector<8x16xf32> to vector<8xf32>
    %120 = vector.shape_cast %119 : vector<8xf32> to vector<8x1xf32>
    %121 = vector.broadcast %120 : vector<8x1xf32> to vector<8x16xf32>
    %122 = arith.cmpf oeq, %117, %121 : vector<8x16xf32>
    %c16_i32_54 = arith.constant 16 : i32
    %123 = vector.broadcast %c16_i32_54 : i32 to vector<8x16xi32>
    %124 = arith.select %122, %7, %123 : vector<8x16xi1>, vector<8x16xi32>
    %cst_55 = arith.constant dense<2147483647> : vector<8xi32>
    %125 = vector.multi_reduction <minsi>, %124, %cst_55 [1] : vector<8x16xi32> to vector<8xi32>
    %126 = vector.shape_cast %125 : vector<8xi32> to vector<8x1xi32>
    %c0_56 = arith.constant 0 : index
    %c7 = arith.constant 7 : index
    %127 = vector.load %arg6[%c0_56, %c7] : memref<8x8xi32, #tpu.memory_space<vmem>>, vector<8x1xi32>
    tpu.vector_store %arg6[%c0_56, %c7], %126 {strides = array<i32>} : memref<8x8xi32, #tpu.memory_space<vmem>>, vector<8x1xi32>,
    return
  }
  func.func @transform_0(%arg0: i32) -> (i32, i32) {
    %c0_i32 = arith.constant 0 : i32
    %c0_i32_0 = arith.constant 0 : i32
    return %arg0, %c0_i32 : i32, i32
  }
  func.func @transform_1(%arg0: i32) -> (i32, i32) {
    %c0_i32 = arith.constant 0 : i32
    %c0_i32_0 = arith.constant 0 : i32
    %c0_i32_1 = arith.constant 0 : i32
    return %c0_i32, %c0_i32_0 : i32, i32
  }
  func.func @transform_2(%arg0: i32) -> (i32, i32) {
    %c0_i32 = arith.constant 0 : i32
    %c0_i32_0 = arith.constant 0 : i32
    %c0_i32_1 = arith.constant 0 : i32
    return %c0_i32, %c0_i32_0 : i32, i32
  }
  func.func @transform_3(%arg0: i32) -> (i32, i32) {
    %c0_i32 = arith.constant 0 : i32
    %c0_i32_0 = arith.constant 0 : i32
    %c0_i32_1 = arith.constant 0 : i32
    return %c0_i32, %c0_i32_0 : i32, i32
  }
  func.func @transform_4(%arg0: i32) -> (i32, i32) {
    %c0_i32 = arith.constant 0 : i32
    %c0_i32_0 = arith.constant 0 : i32
    return %arg0, %c0_i32 : i32, i32
  }
  func.func @transform_5(%arg0: i32) -> (i32, i32) {
    %c0_i32 = arith.constant 0 : i32
    %c0_i32_0 = arith.constant 0 : i32
    return %arg0, %c0_i32 : i32, i32
  }
}

</mosaic_0001>

<llo_original>
// kernel: tpu_custom_call.1
$region0: #{tpu_custom_call.1}
  #allocation0 [shape = 'u32[]', space=smem, size = 0x4, offset = 0x4, fixed_abs, tag = 'smem constant byte address 0x4 - core index']
  #allocation1 [shape = 'u32[144,128]{1,0:T(1,128)}', space=vmem, size = 0x12000, scoped, tag = 'internal scratch']
  %s0 = inlined_call_operand.hbm [shape: f32[8,32], index: 0, kind: input, shape index: {}]
  %s1 = inlined_call_operand.hbm [shape: f32[32,32], index: 1, kind: input, shape index: {}]
  %s2 = inlined_call_operand.vmem [shape: f32[1,32], index: 2, kind: input, shape index: {}]
  %s3 = inlined_call_operand.hbm [shape: f32[32,48], index: 3, kind: input, shape index: {}]
  %s4 = inlined_call_operand.hbm [shape: f32[8,256], index: 4, kind: output, shape index: {0}]
  %s5 = inlined_call_operand.hbm [shape: s32[8,8], index: 5, kind: output, shape index: {1}]
  %6 = xla_tuple %s4, %s5
  %s7 = sld [smem:[#allocation0]]
  $region46: #{tpu_custom_call.1} parent=0
    _
  %s9 = ssub.s32 1, %s7
  %s10 = scalar_select 0, %s9, %s7
  $region1: #{tpu_custom_call.1} parent=0
    #allocation2 [shape = 'u8[4096]{0}', space=vmem, size = 0x1000, scoped, tag = 'input window, operand 0, single buffered']
    #allocation3 [shape = 's32[1]{0}', space=sflag, size = 0x4, scoped, tag = 'scoped memory for tpu_custom_call.1']
    #allocation4 [shape = 's32[1]{0}', space=sflag, size = 0x4, scoped, tag = 'scoped memory for tpu_custom_call.1']
    #allocation5 [shape = 'u8[16384]{0}', space=vmem, size = 0x4000, scoped, tag = 'input window, operand 1, single buffered']
    #allocation6 [shape = 's32[1]{0}', space=sflag, size = 0x4, scoped, tag = 'scoped memory for tpu_custom_call.1']
    #allocation7 [shape = 'u8[16384]{0}', space=vmem, size = 0x4000, scoped, tag = 'input window, operand 3, single buffered']
    #allocation8 [shape = 'u8[8192]{0}', space=vmem, size = 0x2000, scoped, tag = 'output window, operand 0, single buffered']
    #allocation9 [shape = 'u8[4096]{0}', space=vmem, size = 0x1000, scoped, tag = 'output window, operand 1, single buffered']
    #allocation10 [shape = 's32[1]{0}', space=sflag, size = 0x4, scoped, tag = 'scoped memory for tpu_custom_call.1']
    %11 = vsyncpa [#allocation3], 0
    %12 = vsyncpa [#allocation6], 0
    %13 = vsyncpa [#allocation4], 0
    %14 = vsyncpa [#allocation10], 0
    // Predicated region
    $region2: #{tpu_custom_call.1} parent=1 // pred_check
      _
    $region3: #{tpu_custom_call.1} parent=1 // pred_check_branch
      %16 = sbr.rel (0) target = $region5
    $region4: #{tpu_custom_call.1} parent=1 // pred_region
      %s18 = ssub.s32 128, 128
      %19 = vsyncadd [#allocation3], %s18
      %s21 = sshll.u32 [#allocation2], 4
      %s22 = int_to_ptr.vmem [resolvable:$true] %s21
      %24 = dma.hbm_to_vmem [thread:$0]  %s0, 128, %s22, [#allocation3]
    $region5: #{tpu_custom_call.1} parent=1 // pred_fallthru
      _
    // Predicated region
    $region6: #{tpu_custom_call.1} parent=1 // pred_check
      _
    $region7: #{tpu_custom_call.1} parent=1 // pred_check_branch
      %26 = sbr.rel (0) target = $region9
    $region8: #{tpu_custom_call.1} parent=1 // pred_region
      %s28 = ssub.s32 512, 512
      %29 = vsyncadd [#allocation6], %s28
      %s30 = sshll.u32 [#allocation5], 4
      %s31 = int_to_ptr.vmem [resolvable:$true] %s30
      %36 = dma.hbm_to_vmem [thread:$0]  %s1, 512, %s31, [#allocation6], 128, 128, 8
    $region9: #{tpu_custom_call.1} parent=1 // pred_fallthru
      _
    // Predicated region
    $region10: #{tpu_custom_call.1} parent=1 // pred_check
      _
    $region11: #{tpu_custom_call.1} parent=1 // pred_check_branch
      %38 = sbr.rel (0) target = $region13
    $region12: #{tpu_custom_call.1} parent=1 // pred_region
      _
    $region13: #{tpu_custom_call.1} parent=1 // pred_fallthru
      _
    // Predicated region
    $region14: #{tpu_custom_call.1} parent=1 // pred_check
      _
    $region15: #{tpu_custom_call.1} parent=1 // pred_check_branch
      %40 = sbr.rel (0) target = $region17
    $region16: #{tpu_custom_call.1} parent=1 // pred_region
      %s42 = ssub.s32 512, 512
      %43 = vsyncadd [#allocation6], %s42
      %s44 = sshll.u32 [#allocation7], 4
      %s45 = int_to_ptr.vmem [resolvable:$true] %s44
      %50 = dma.hbm_to_vmem [thread:$0]  %s3, 512, %s45, [#allocation6], 128, 128, 8
    $region17: #{tpu_custom_call.1} parent=1 // pred_fallthru
      _
    // Predicated region
    $region18: #{tpu_custom_call.1} parent=1 // pred_check
      _
    $region19: #{tpu_custom_call.1} parent=1 // pred_check_branch
      %52 = sbr.rel (0) target = $region21
    $region20: #{tpu_custom_call.1} parent=1 // pred_region
      %53 = dma.done [#allocation3], 128
    $region21: #{tpu_custom_call.1} parent=1 // pred_fallthru
      _
    // Predicated region
    $region22: #{tpu_custom_call.1} parent=1 // pred_check
      _
    $region23: #{tpu_custom_call.1} parent=1 // pred_check_branch
      %55 = sbr.rel (0) target = $region25
    $region24: #{tpu_custom_call.1} parent=1 // pred_region
      %56 = dma.done [#allocation6], 512
    $region25: #{tpu_custom_call.1} parent=1 // pred_fallthru
      _
    // Predicated region
    $region26: #{tpu_custom_call.1} parent=1 // pred_check
      _
    $region27: #{tpu_custom_call.1} parent=1 // pred_check_branch
      %58 = sbr.rel (0) target = $region29
    $region28: #{tpu_custom_call.1} parent=1 // pred_region
      %59 = dma.done [#allocation6], 512
    $region29: #{tpu_custom_call.1} parent=1 // pred_fallthru
      _
    %v60 = vld [vmem:[#allocation2] sm:$0xff]
    %v61 = vld [vmem:[#allocation5] sm:$0xff]
    %v62 = vld [vmem:[#allocation5 + $0x8] sm:$0xff]
    %v63 = vld [vmem:[#allocation5 + $0x10] sm:$0xff]
    %v64 = vld [vmem:[#allocation5 + $0x18] sm:$0xff]
    %v65 = vld [vmem:[%s2] sm:$0x1]
    %v66 = vld [vmem:[#allocation7] sm:$0xff]
    %v67 = vld [vmem:[#allocation7 + $0x8] sm:$0xff]
    %v68 = vld [vmem:[#allocation7 + $0x10] sm:$0xff]
    %v69 = vld [vmem:[#allocation7 + $0x18] sm:$0xff]
    %v71 = vlaneseq
    %v72 = vshrl.u32 %v71, 7
    %v73 = vsub.s32 0, %v72
    %v74 = vrot.slane %v65, %v73
    %vm76 = vcmask 261120
    %v78 = vsel %vm76, %v60, 0
    %80 = vmatprep.subr.mxu0 0.0
    %81 = vmatpush1.msra.mxu0 0.0
    %82 = vmatprep.subr.mxu0 0.0
    %83 = vmatpush1.msra.mxu0 0.0
    %84 = vmatprep.subr.mxu0 0.0
    %85 = vmatpush1.msra.mxu0 0.0
    %86 = vmatprep.subr.mxu0 0.0
    %87 = vmatpush1.msra.mxu0 0.0
    %88 = vmatprep.subr.mxu0 0.0
    %89 = vmatpush1.msra.mxu0 0.0
    %90 = vmatprep.subr.mxu0 0.0
    %91 = vmatpush1.msra.mxu0 0.0
    %92 = vmatprep.subr.mxu0 0.0
    %93 = vmatpush1.msra.mxu0 0.0
    %94 = vmatprep.subr.mxu0 0.0
    %95 = vmatpush1.msra.mxu0 0.0
    %96 = vmatprep.subr.mxu0 0.0
    %97 = vmatpush1.msra.mxu0 0.0
    %98 = vmatprep.subr.mxu0 0.0
    %99 = vmatpush1.msra.mxu0 0.0
    %100 = vmatprep.subr.mxu0 0.0
    %101 = vmatpush1.msra.mxu0 0.0
    %102 = vmatprep.subr.mxu0 0.0
    %103 = vmatpush1.msra.mxu0 0.0
    %104 = vmatprep.subr.mxu0 0.0
    %105 = vmatpush1.msra.mxu0 %v64
    %106 = vmatprep.subr.mxu0 0.0
    %107 = vmatpush1.msra.mxu0 %v63
    %108 = vmatprep.subr.mxu0 0.0
    %109 = vmatpush1.msra.mxu0 %v62
    %110 = vmatprep.subr.mxu0 0.0
    %111 = vmatpush1.msra.mxu0 %v61
    %112 = vmatprep.subr.mxu0 0.0
    %113 = vmatpush2.msra.mxu0 0.0
    %114 = vmatprep.subr.mxu0 0.0
    %115 = vmatpush2.msra.mxu0 0.0
    %116 = vmatprep.subr.mxu0 0.0
    %117 = vmatpush2.msra.mxu0 0.0
    %118 = vmatprep.subr.mxu0 0.0
    %119 = vmatpush2.msra.mxu0 0.0
    %120 = vmatprep.subr.mxu0 0.0
    %121 = vmatpush2.msra.mxu0 0.0
    %122 = vmatprep.subr.mxu0 0.0
    %123 = vmatpush2.msra.mxu0 0.0
    %124 = vmatprep.subr.mxu0 0.0
    %125 = vmatpush2.msra.mxu0 0.0
    %126 = vmatprep.subr.mxu0 0.0
    %127 = vmatpush2.msra.mxu0 0.0
    %128 = vmatprep.subr.mxu0 0.0
    %129 = vmatpush2.msra.mxu0 0.0
    %130 = vmatprep.subr.mxu0 0.0
    %131 = vmatpush2.msra.mxu0 0.0
    %132 = vmatprep.subr.mxu0 0.0
    %133 = vmatpush2.msra.mxu0 0.0
    %134 = vmatprep.subr.mxu0 0.0
    %135 = vmatpush2.msra.mxu0 0.0
    %136 = vmatprep.subr.mxu0 0.0
    %137 = vmatpush2.msra.mxu0 0.0
    %138 = vmatprep.subr.mxu0 0.0
    %139 = vmatpush2.msra.mxu0 0.0
    %140 = vmatprep.subr.mxu0 0.0
    %141 = vmatpush2.msra.mxu0 0.0
    %142 = vmatprep.subr.mxu0 0.0
    %143 = vmatpush2.msra.mxu0 0.0
    %144 = vmatprep.mubr.f32.mxu0 0.0
    %145 = vmatmul.mubr.f32.gmra.mxu0 %v78
    %v146 = vpop.f32.mrf.mxu0
    %v147 = vadd.f32 %v74, %v146
    %v148 = vpop.f32.mrf.mxu0
    %149 = vdwg.mxu0
    %v150 = vlaneseq
    %v151 = vand.u32 %v150, 127
    %v152 = vadd.f32 %v147, 0.0
    %v153 = vtanh.pop %v152
    %v155 = vsel %vm76, %v153, 0
    %157 = vmatprep.subr.mxu0 0.0
    %158 = vmatpush1.msra.mxu0 0.0
    %159 = vmatprep.subr.mxu0 0.0
    %160 = vmatpush1.msra.mxu0 0.0
    %161 = vmatprep.subr.mxu0 0.0
    %162 = vmatpush1.msra.mxu0 0.0
    %163 = vmatprep.subr.mxu0 0.0
    %164 = vmatpush1.msra.mxu0 0.0
    %165 = vmatprep.subr.mxu0 0.0
    %166 = vmatpush1.msra.mxu0 0.0
    %167 = vmatprep.subr.mxu0 0.0
    %168 = vmatpush1.msra.mxu0 0.0
    %169 = vmatprep.subr.mxu0 0.0
    %170 = vmatpush1.msra.mxu0 0.0
    %171 = vmatprep.subr.mxu0 0.0
    %172 = vmatpush1.msra.mxu0 0.0
    %173 = vmatprep.subr.mxu0 0.0
    %174 = vmatpush1.msra.mxu0 0.0
    %175 = vmatprep.subr.mxu0 0.0
    %176 = vmatpush1.msra.mxu0 0.0
    %177 = vmatprep.subr.mxu0 0.0
    %178 = vmatpush1.msra.mxu0 0.0
    %179 = vmatprep.subr.mxu0 0.0
    %180 = vmatpush1.msra.mxu0 0.0
    %181 = vmatprep.subr.mxu0 0.0
    %182 = vmatpush1.msra.mxu0 %v69
    %183 = vmatprep.subr.mxu0 0.0
    %184 = vmatpush1.msra.mxu0 %v68
    %185 = vmatprep.subr.mxu0 0.0
    %186 = vmatpush1.msra.mxu0 %v67
    %187 = vmatprep.subr.mxu0 0.0
    %188 = vmatpush1.msra.mxu0 %v66
    %189 = vmatprep.subr.mxu0 0.0
    %190 = vmatpush2.msra.mxu0 0.0
    %191 = vmatprep.subr.mxu0 0.0
    %192 = vmatpush2.msra.mxu0 0.0
    %193 = vmatprep.subr.mxu0 0.0
    %194 = vmatpush2.msra.mxu0 0.0
    %195 = vmatprep.subr.mxu0 0.0
    %196 = vmatpush2.msra.mxu0 0.0
    %197 = vmatprep.subr.mxu0 0.0
    %198 = vmatpush2.msra.mxu0 0.0
    %199 = vmatprep.subr.mxu0 0.0
    %200 = vmatpush2.msra.mxu0 0.0
    %201 = vmatprep.subr.mxu0 0.0
    %202 = vmatpush2.msra.mxu0 0.0
    %203 = vmatprep.subr.mxu0 0.0
    %204 = vmatpush2.msra.mxu0 0.0
    %205 = vmatprep.subr.mxu0 0.0
    %206 = vmatpush2.msra.mxu0 0.0
    %207 = vmatprep.subr.mxu0 0.0
    %208 = vmatpush2.msra.mxu0 0.0
    %209 = vmatprep.subr.mxu0 0.0
    %210 = vmatpush2.msra.mxu0 0.0
    %211 = vmatprep.subr.mxu0 0.0
    %212 = vmatpush2.msra.mxu0 0.0
    %213 = vmatprep.subr.mxu0 0.0
    %214 = vmatpush2.msra.mxu0 0.0
    %215 = vmatprep.subr.mxu0 0.0
    %216 = vmatpush2.msra.mxu0 0.0
    %217 = vmatprep.subr.mxu0 0.0
    %218 = vmatpush2.msra.mxu0 0.0
    %219 = vmatprep.subr.mxu0 0.0
    %220 = vmatpush2.msra.mxu0 0.0
    %221 = vmatprep.mubr.f32.mxu0 0.0
    %222 = vmatmul.mubr.f32.gmra.mxu0 %v155
    %v223 = vpop.f32.mrf.mxu0
    %v224 = vadd.f32 0.0, %v223
    %v225 = vpop.f32.mrf.mxu0
    %226 = vdwg.mxu0
    %227 = vst.msk [vmem:[#allocation8] sm:$0xff] %vm76, %v153
    %vm228 = vcmask 392448
    %v229 = vsel %vm228, %v224, -inf
    %230 = vmax.xlane.f32.xlu0 %v229
    %v231 = vpop.xlane.xlu0 %230
    %vm232 = vcmp.eq.f32.partialorder %v224, %v231
    %233 = vrot.lane.b32.xlu0 %v151, 32
    %v234 = vpop.permute.xlu0 %233
    %v235 = vsel %vm232, %v234, 16
    %v236 = vsel %vm228, %v235, 2147483647
    %v237 = vand.u32 %v236, 65535
    %v238 = vshra.s32 %v236, 16
    %v239 = vcvt.s32.f32 %v237
    %v240 = vcvt.s32.f32 %v238
    %241 = vmin.xlane.f32.xlu0 %v240
    %v242 = vpop.xlane.xlu0 %241
    %vm243 = vcmp.eq.f32.partialorder %v240, %v242
    %v244 = vsel %vm243, %v239, inf
    %245 = vmin.xlane.f32.xlu0 %v244
    %v246 = vpop.xlane.xlu0 %245
    %v247 = vcvt.f32.s32 %v246
    %v248 = vcvt.f32.s32 %v242
    %v249 = vshll.u32 %v248, 16
    %v250 = vadd.s32 %v249, %v247
    %vm251 = vcmask 7168
    %252 = vst.msk [vmem:[#allocation9] sm:$0xff] %vm251, %v250
    %v253 = vadd.f32 %v147, %v224
    %v254 = vtanh.pop %v253
    %v256 = vsel %vm76, %v254, 0
    %258 = vmatprep.subr.mxu0 0.0
    %259 = vmatpush1.msra.mxu0 0.0
    %260 = vmatprep.subr.mxu0 0.0
    %261 = vmatpush1.msra.mxu0 0.0
    %262 = vmatprep.subr.mxu0 0.0
    %263 = vmatpush1.msra.mxu0 0.0
    %264 = vmatprep.subr.mxu0 0.0
    %265 = vmatpush1.msra.mxu0 0.0
    %266 = vmatprep.subr.mxu0 0.0
    %267 = vmatpush1.msra.mxu0 0.0
    %268 = vmatprep.subr.mxu0 0.0
    %269 = vmatpush1.msra.mxu0 0.0
    %270 = vmatprep.subr.mxu0 0.0
    %271 = vmatpush1.msra.mxu0 0.0
    %272 = vmatprep.subr.mxu0 0.0
    %273 = vmatpush1.msra.mxu0 0.0
    %274 = vmatprep.subr.mxu0 0.0
    %275 = vmatpush1.msra.mxu0 0.0
    %276 = vmatprep.subr.mxu0 0.0
    %277 = vmatpush1.msra.mxu0 0.0
    %278 = vmatprep.subr.mxu0 0.0
    %279 = vmatpush1.msra.mxu0 0.0
    %280 = vmatprep.subr.mxu0 0.0
    %281 = vmatpush1.msra.mxu0 0.0
    %282 = vmatprep.subr.mxu0 0.0
    %283 = vmatpush1.msra.mxu0 %v69
    %284 = vmatprep.subr.mxu0 0.0
    %285 = vmatpush1.msra.mxu0 %v68
    %286 = vmatprep.subr.mxu0 0.0
    %287 = vmatpush1.msra.mxu0 %v67
    %288 = vmatprep.subr.mxu0 0.0
    %289 = vmatpush1.msra.mxu0 %v66
    %290 = vmatprep.subr.mxu0 0.0
    %291 = vmatpush2.msra.mxu0 0.0
    %292 = vmatprep.subr.mxu0 0.0
    %293 = vmatpush2.msra.mxu0 0.0
    %294 = vmatprep.subr.mxu0 0.0
    %295 = vmatpush2.msra.mxu0 0.0
    %296 = vmatprep.subr.mxu0 0.0
    %297 = vmatpush2.msra.mxu0 0.0
    %298 = vmatprep.subr.mxu0 0.0
    %299 = vmatpush2.msra.mxu0 0.0
    %300 = vmatprep.subr.mxu0 0.0
    %301 = vmatpush2.msra.mxu0 0.0
    %302 = vmatprep.subr.mxu0 0.0
    %303 = vmatpush2.msra.mxu0 0.0
    %304 = vmatprep.subr.mxu0 0.0
    %305 = vmatpush2.msra.mxu0 0.0
    %306 = vmatprep.subr.mxu0 0.0
    %307 = vmatpush2.msra.mxu0 0.0
    %308 = vmatprep.subr.mxu0 0.0
    %309 = vmatpush2.msra.mxu0 0.0
    %310 = vmatprep.subr.mxu0 0.0
    %311 = vmatpush2.msra.mxu0 0.0
    %312 = vmatprep.subr.mxu0 0.0
    %313 = vmatpush2.msra.mxu0 0.0
    %314 = vmatprep.subr.mxu0 0.0
    %315 = vmatpush2.msra.mxu0 0.0
    %316 = vmatprep.subr.mxu0 0.0
    %317 = vmatpush2.msra.mxu0 0.0
    %318 = vmatprep.subr.mxu0 0.0
    %319 = vmatpush2.msra.mxu0 0.0
    %320 = vmatprep.subr.mxu0 0.0
    %321 = vmatpush2.msra.mxu0 0.0
    %322 = vmatprep.mubr.f32.mxu0 0.0
    %323 = vmatmul.mubr.f32.gmra.mxu0 %v256
    %v324 = vpop.f32.mrf.mxu0
    %v325 = vadd.f32 0.0, %v324
    %v326 = vpop.f32.mrf.mxu0
    %327 = vdwg.mxu0
    %328 = vrot.lane.b32.xlu0 %v254, 32
    %v329 = vpop.permute.xlu0 %328
    %vm331 = vcmask 523520
    %332 = vst.msk [vmem:[#allocation8] sm:$0xff] %vm331, %v329
    %v333 = vsel %vm228, %v325, -inf
    %334 = vmax.xlane.f32.xlu0 %v333
    %v335 = vpop.xlane.xlu0 %334
    %vm336 = vcmp.eq.f32.partialorder %v325, %v335
    %v337 = vsel %vm336, %v234, 16
    %v338 = vsel %vm228, %v337, 2147483647
    %v339 = vand.u32 %v338, 65535
    %v340 = vshra.s32 %v338, 16
    %v341 = vcvt.s32.f32 %v339
    %v342 = vcvt.s32.f32 %v340
    %343 = vmin.xlane.f32.xlu0 %v342
    %v344 = vpop.xlane.xlu0 %343
    %vm345 = vcmp.eq.f32.partialorder %v342, %v344
    %v346 = vsel %vm345, %v341, inf
    %347 = vmin.xlane.f32.xlu0 %v346
    %v348 = vpop.xlane.xlu0 %347
    %v349 = vcvt.f32.s32 %v348
    %v350 = vcvt.f32.s32 %v344
    %v351 = vshll.u32 %v350, 16
    %v352 = vadd.s32 %v351, %v349
    %vm353 = vcmask 15368
    %354 = vst.msk [vmem:[#allocation9] sm:$0xff] %vm353, %v352
    %v355 = vadd.f32 %v147, %v325
    %v356 = vtanh.pop %v355
    %v358 = vsel %vm76, %v356, 0
    %360 = vmatprep.subr.mxu0 0.0
    %361 = vmatpush1.msra.mxu0 0.0
    %362 = vmatprep.subr.mxu0 0.0
    %363 = vmatpush1.msra.mxu0 0.0
    %364 = vmatprep.subr.mxu0 0.0
    %365 = vmatpush1.msra.mxu0 0.0
    %366 = vmatprep.subr.mxu0 0.0
    %367 = vmatpush1.msra.mxu0 0.0
    %368 = vmatprep.subr.mxu0 0.0
    %369 = vmatpush1.msra.mxu0 0.0
    %370 = vmatprep.subr.mxu0 0.0
    %371 = vmatpush1.msra.mxu0 0.0
    %372 = vmatprep.subr.mxu0 0.0
    %373 = vmatpush1.msra.mxu0 0.0
    %374 = vmatprep.subr.mxu0 0.0
    %375 = vmatpush1.msra.mxu0 0.0
    %376 = vmatprep.subr.mxu0 0.0
    %377 = vmatpush1.msra.mxu0 0.0
    %378 = vmatprep.subr.mxu0 0.0
    %379 = vmatpush1.msra.mxu0 0.0
    %380 = vmatprep.subr.mxu0 0.0
    %381 = vmatpush1.msra.mxu0 0.0
    %382 = vmatprep.subr.mxu0 0.0
    %383 = vmatpush1.msra.mxu0 0.0
    %384 = vmatprep.subr.mxu0 0.0
    %385 = vmatpush1.msra.mxu0 %v69
    %386 = vmatprep.subr.mxu0 0.0
    %387 = vmatpush1.msra.mxu0 %v68
    %388 = vmatprep.subr.mxu0 0.0
    %389 = vmatpush1.msra.mxu0 %v67
    %390 = vmatprep.subr.mxu0 0.0
    %391 = vmatpush1.msra.mxu0 %v66
    %392 = vmatprep.subr.mxu0 0.0
    %393 = vmatpush2.msra.mxu0 0.0
    %394 = vmatprep.subr.mxu0 0.0
    %395 = vmatpush2.msra.mxu0 0.0
    %396 = vmatprep.subr.mxu0 0.0
    %397 = vmatpush2.msra.mxu0 0.0
    %398 = vmatprep.subr.mxu0 0.0
    %399 = vmatpush2.msra.mxu0 0.0
    %400 = vmatprep.subr.mxu0 0.0
    %401 = vmatpush2.msra.mxu0 0.0
    %402 = vmatprep.subr.mxu0 0.0
    %403 = vmatpush2.msra.mxu0 0.0
    %404 = vmatprep.subr.mxu0 0.0
    %405 = vmatpush2.msra.mxu0 0.0
    %406 = vmatprep.subr.mxu0 0.0
    %407 = vmatpush2.msra.mxu0 0.0
    %408 = vmatprep.subr.mxu0 0.0
    %409 = vmatpush2.msra.mxu0 0.0
    %410 = vmatprep.subr.mxu0 0.0
    %411 = vmatpush2.msra.mxu0 0.0
    %412 = vmatprep.subr.mxu0 0.0
    %413 = vmatpush2.msra.mxu0 0.0
    %414 = vmatprep.subr.mxu0 0.0
    %415 = vmatpush2.msra.mxu0 0.0
    %416 = vmatprep.subr.mxu0 0.0
    %417 = vmatpush2.msra.mxu0 0.0
    %418 = vmatprep.subr.mxu0 0.0
    %419 = vmatpush2.msra.mxu0 0.0
    %420 = vmatprep.subr.mxu0 0.0
    %421 = vmatpush2.msra.mxu0 0.0
    %422 = vmatprep.subr.mxu0 0.0
    %423 = vmatpush2.msra.mxu0 0.0
    %424 = vmatprep.mubr.f32.mxu0 0.0
    %425 = vmatmul.mubr.f32.gmra.mxu0 %v358
    %v426 = vpop.f32.mrf.mxu0
    %v427 = vadd.f32 0.0, %v426
    %v428 = vpop.f32.mrf.mxu0
    %429 = vdwg.mxu0
    %430 = vrot.lane.b32.xlu0 %v356, 64
    %v431 = vpop.permute.xlu0 %430
    %vm433 = vcmask 785920
    %434 = vst.msk [vmem:[#allocation8] sm:$0xff] %vm433, %v431
    %v435 = vsel %vm228, %v427, -inf
    %436 = vmax.xlane.f32.xlu0 %v435
    %v437 = vpop.xlane.xlu0 %436
    %vm438 = vcmp.eq.f32.partialorder %v427, %v437
    %v439 = vsel %vm438, %v234, 16
    %v440 = vsel %vm228, %v439, 2147483647
    %v441 = vand.u32 %v440, 65535
    %v442 = vshra.s32 %v440, 16
    %v443 = vcvt.s32.f32 %v441
    %v444 = vcvt.s32.f32 %v442
    %445 = vmin.xlane.f32.xlu0 %v444
    %v446 = vpop.xlane.xlu0 %445
    %vm447 = vcmp.eq.f32.partialorder %v444, %v446
    %v448 = vsel %vm447, %v443, inf
    %449 = vmin.xlane.f32.xlu0 %v448
    %v450 = vpop.xlane.xlu0 %449
    %v451 = vcvt.f32.s32 %v450
    %v452 = vcvt.f32.s32 %v446
    %v453 = vshll.u32 %v452, 16
    %v454 = vadd.s32 %v453, %v451
    %vm455 = vcmask 23568
    %456 = vst.msk [vmem:[#allocation9] sm:$0xff] %vm455, %v454
    %v457 = vadd.f32 %v147, %v427
    %v458 = vtanh.pop %v457
    %v460 = vsel %vm76, %v458, 0
    %462 = vmatprep.subr.mxu0 0.0
    %463 = vmatpush1.msra.mxu0 0.0
    %464 = vmatprep.subr.mxu0 0.0
    %465 = vmatpush1.msra.mxu0 0.0
    %466 = vmatprep.subr.mxu0 0.0
    %467 = vmatpush1.msra.mxu0 0.0
    %468 = vmatprep.subr.mxu0 0.0
    %469 = vmatpush1.msra.mxu0 0.0
    %470 = vmatprep.subr.mxu0 0.0
    %471 = vmatpush1.msra.mxu0 0.0
    %472 = vmatprep.subr.mxu0 0.0
    %473 = vmatpush1.msra.mxu0 0.0
    %474 = vmatprep.subr.mxu0 0.0
    %475 = vmatpush1.msra.mxu0 0.0
    %476 = vmatprep.subr.mxu0 0.0
    %477 = vmatpush1.msra.mxu0 0.0
    %478 = vmatprep.subr.mxu0 0.0
    %479 = vmatpush1.msra.mxu0 0.0
    %480 = vmatprep.subr.mxu0 0.0
    %481 = vmatpush1.msra.mxu0 0.0
    %482 = vmatprep.subr.mxu0 0.0
    %483 = vmatpush1.msra.mxu0 0.0
    %484 = vmatprep.subr.mxu0 0.0
    %485 = vmatpush1.msra.mxu0 0.0
    %486 = vmatprep.subr.mxu0 0.0
    %487 = vmatpush1.msra.mxu0 %v69
    %488 = vmatprep.subr.mxu0 0.0
    %489 = vmatpush1.msra.mxu0 %v68
    %490 = vmatprep.subr.mxu0 0.0
    %491 = vmatpush1.msra.mxu0 %v67
    %492 = vmatprep.subr.mxu0 0.0
    %493 = vmatpush1.msra.mxu0 %v66
    %494 = vmatprep.subr.mxu0 0.0
    %495 = vmatpush2.msra.mxu0 0.0
    %496 = vmatprep.subr.mxu0 0.0
    %497 = vmatpush2.msra.mxu0 0.0
    %498 = vmatprep.subr.mxu0 0.0
    %499 = vmatpush2.msra.mxu0 0.0
    %500 = vmatprep.subr.mxu0 0.0
    %501 = vmatpush2.msra.mxu0 0.0
    %502 = vmatprep.subr.mxu0 0.0
    %503 = vmatpush2.msra.mxu0 0.0
    %504 = vmatprep.subr.mxu0 0.0
    %505 = vmatpush2.msra.mxu0 0.0
    %506 = vmatprep.subr.mxu0 0.0
    %507 = vmatpush2.msra.mxu0 0.0
    %508 = vmatprep.subr.mxu0 0.0
    %509 = vmatpush2.msra.mxu0 0.0
    %510 = vmatprep.subr.mxu0 0.0
    %511 = vmatpush2.msra.mxu0 0.0
    %512 = vmatprep.subr.mxu0 0.0
    %513 = vmatpush2.msra.mxu0 0.0
    %514 = vmatprep.subr.mxu0 0.0
    %515 = vmatpush2.msra.mxu0 0.0
    %516 = vmatprep.subr.mxu0 0.0
    %517 = vmatpush2.msra.mxu0 0.0
    %518 = vmatprep.subr.mxu0 0.0
    %519 = vmatpush2.msra.mxu0 0.0
    %520 = vmatprep.subr.mxu0 0.0
    %521 = vmatpush2.msra.mxu0 0.0
    %522 = vmatprep.subr.mxu0 0.0
    %523 = vmatpush2.msra.mxu0 0.0
    %524 = vmatprep.subr.mxu0 0.0
    %525 = vmatpush2.msra.mxu0 0.0
    %526 = vmatprep.mubr.f32.mxu0 0.0
    %527 = vmatmul.mubr.f32.gmra.mxu0 %v460
    %v528 = vpop.f32.mrf.mxu0
    %v529 = vadd.f32 0.0, %v528
    %v530 = vpop.f32.mrf.mxu0
    %531 = vdwg.mxu0
    %532 = vrot.lane.b32.xlu0 %v458, 96
    %v533 = vpop.permute.xlu0 %532
    %vm535 = vcmask 1048320
    %536 = vst.msk [vmem:[#allocation8] sm:$0xff] %vm535, %v533
    %v537 = vsel %vm228, %v529, -inf
    %538 = vmax.xlane.f32.xlu0 %v537
    %v539 = vpop.xlane.xlu0 %538
    %vm540 = vcmp.eq.f32.partialorder %v529, %v539
    %v541 = vsel %vm540, %v234, 16
    %v542 = vsel %vm228, %v541, 2147483647
    %v543 = vand.u32 %v542, 65535
    %v544 = vshra.s32 %v542, 16
    %v545 = vcvt.s32.f32 %v543
    %v546 = vcvt.s32.f32 %v544
    %547 = vmin.xlane.f32.xlu0 %v546
    %v548 = vpop.xlane.xlu0 %547
    %vm549 = vcmp.eq.f32.partialorder %v546, %v548
    %v550 = vsel %vm549, %v545, inf
    %551 = vmin.xlane.f32.xlu0 %v550
    %v552 = vpop.xlane.xlu0 %551
    %v553 = vcvt.f32.s32 %v552
    %v554 = vcvt.f32.s32 %v548
    %v555 = vshll.u32 %v554, 16
    %v556 = vadd.s32 %v555, %v553
    %vm557 = vcmask 31768
    %558 = vst.msk [vmem:[#allocation9] sm:$0xff] %vm557, %v556
    %v559 = vadd.f32 %v147, %v529
    %v560 = vtanh.pop %v559
    %v562 = vsel %vm76, %v560, 0
    %564 = vmatprep.subr.mxu0 0.0
    %565 = vmatpush1.msra.mxu0 0.0
    %566 = vmatprep.subr.mxu0 0.0
    %567 = vmatpush1.msra.mxu0 0.0
    %568 = vmatprep.subr.mxu0 0.0
    %569 = vmatpush1.msra.mxu0 0.0
    %570 = vmatprep.subr.mxu0 0.0
    %571 = vmatpush1.msra.mxu0 0.0
    %572 = vmatprep.subr.mxu0 0.0
    %573 = vmatpush1.msra.mxu0 0.0
    %574 = vmatprep.subr.mxu0 0.0
    %575 = vmatpush1.msra.mxu0 0.0
    %576 = vmatprep.subr.mxu0 0.0
    %577 = vmatpush1.msra.mxu0 0.0
    %578 = vmatprep.subr.mxu0 0.0
    %579 = vmatpush1.msra.mxu0 0.0
    %580 = vmatprep.subr.mxu0 0.0
    %581 = vmatpush1.msra.mxu0 0.0
    %582 = vmatprep.subr.mxu0 0.0
    %583 = vmatpush1.msra.mxu0 0.0
    %584 = vmatprep.subr.mxu0 0.0
    %585 = vmatpush1.msra.mxu0 0.0
    %586 = vmatprep.subr.mxu0 0.0
    %587 = vmatpush1.msra.mxu0 0.0
    %588 = vmatprep.subr.mxu0 0.0
    %589 = vmatpush1.msra.mxu0 %v69
    %590 = vmatprep.subr.mxu0 0.0
    %591 = vmatpush1.msra.mxu0 %v68
    %592 = vmatprep.subr.mxu0 0.0
    %593 = vmatpush1.msra.mxu0 %v67
    %594 = vmatprep.subr.mxu0 0.0
    %595 = vmatpush1.msra.mxu0 %v66
    %596 = vmatprep.subr.mxu0 0.0
    %597 = vmatpush2.msra.mxu0 0.0
    %598 = vmatprep.subr.mxu0 0.0
    %599 = vmatpush2.msra.mxu0 0.0
    %600 = vmatprep.subr.mxu0 0.0
    %601 = vmatpush2.msra.mxu0 0.0
    %602 = vmatprep.subr.mxu0 0.0
    %603 = vmatpush2.msra.mxu0 0.0
    %604 = vmatprep.subr.mxu0 0.0
    %605 = vmatpush2.msra.mxu0 0.0
    %606 = vmatprep.subr.mxu0 0.0
    %607 = vmatpush2.msra.mxu0 0.0
    %608 = vmatprep.subr.mxu0 0.0
    %609 = vmatpush2.msra.mxu0 0.0
    %610 = vmatprep.subr.mxu0 0.0
    %611 = vmatpush2.msra.mxu0 0.0
    %612 = vmatprep.subr.mxu0 0.0
    %613 = vmatpush2.msra.mxu0 0.0
    %614 = vmatprep.subr.mxu0 0.0
    %615 = vmatpush2.msra.mxu0 0.0
    %616 = vmatprep.subr.mxu0 0.0
    %617 = vmatpush2.msra.mxu0 0.0
    %618 = vmatprep.subr.mxu0 0.0
    %619 = vmatpush2.msra.mxu0 0.0
    %620 = vmatprep.subr.mxu0 0.0
    %621 = vmatpush2.msra.mxu0 0.0
    %622 = vmatprep.subr.mxu0 0.0
    %623 = vmatpush2.msra.mxu0 0.0
    %624 = vmatprep.subr.mxu0 0.0
    %625 = vmatpush2.msra.mxu0 0.0
    %626 = vmatprep.subr.mxu0 0.0
    %627 = vmatpush2.msra.mxu0 0.0
    %628 = vmatprep.mubr.f32.mxu0 0.0
    %629 = vmatmul.mubr.f32.gmra.mxu0 %v562
    %v630 = vpop.f32.mrf.mxu0
    %v631 = vadd.f32 0.0, %v630
    %v632 = vpop.f32.mrf.mxu0
    %633 = vdwg.mxu0
    %634 = vst.msk [vmem:[#allocation8 + $0x8] sm:$0xff] %vm76, %v560
    %v635 = vsel %vm228, %v631, -inf
    %636 = vmax.xlane.f32.xlu0 %v635
    %v637 = vpop.xlane.xlu0 %636
    %vm638 = vcmp.eq.f32.partialorder %v631, %v637
    %v639 = vsel %vm638, %v234, 16
    %v640 = vsel %vm228, %v639, 2147483647
    %v641 = vand.u32 %v640, 65535
    %v642 = vshra.s32 %v640, 16
    %v643 = vcvt.s32.f32 %v641
    %v644 = vcvt.s32.f32 %v642
    %645 = vmin.xlane.f32.xlu0 %v644
    %v646 = vpop.xlane.xlu0 %645
    %vm647 = vcmp.eq.f32.partialorder %v644, %v646
    %v648 = vsel %vm647, %v643, inf
    %649 = vmin.xlane.f32.xlu0 %v648
    %v650 = vpop.xlane.xlu0 %649
    %v651 = vcvt.f32.s32 %v650
    %v652 = vcvt.f32.s32 %v646
    %v653 = vshll.u32 %v652, 16
    %v654 = vadd.s32 %v653, %v651
    %vm655 = vcmask 39968
    %656 = vst.msk [vmem:[#allocation9] sm:$0xff] %vm655, %v654
    %v657 = vadd.f32 %v147, %v631
    %v658 = vtanh.pop %v657
    %v660 = vsel %vm76, %v658, 0
    %662 = vmatprep.subr.mxu0 0.0
    %663 = vmatpush1.msra.mxu0 0.0
    %664 = vmatprep.subr.mxu0 0.0
    %665 = vmatpush1.msra.mxu0 0.0
    %666 = vmatprep.subr.mxu0 0.0
    %667 = vmatpush1.msra.mxu0 0.0
    %668 = vmatprep.subr.mxu0 0.0
    %669 = vmatpush1.msra.mxu0 0.0
    %670 = vmatprep.subr.mxu0 0.0
    %671 = vmatpush1.msra.mxu0 0.0
    %672 = vmatprep.subr.mxu0 0.0
    %673 = vmatpush1.msra.mxu0 0.0
    %674 = vmatprep.subr.mxu0 0.0
    %675 = vmatpush1.msra.mxu0 0.0
    %676 = vmatprep.subr.mxu0 0.0
    %677 = vmatpush1.msra.mxu0 0.0
    %678 = vmatprep.subr.mxu0 0.0
    %679 = vmatpush1.msra.mxu0 0.0
    %680 = vmatprep.subr.mxu0 0.0
    %681 = vmatpush1.msra.mxu0 0.0
    %682 = vmatprep.subr.mxu0 0.0
    %683 = vmatpush1.msra.mxu0 0.0
    %684 = vmatprep.subr.mxu0 0.0
    %685 = vmatpush1.msra.mxu0 0.0
    %686 = vmatprep.subr.mxu0 0.0
    %687 = vmatpush1.msra.mxu0 %v69
    %688 = vmatprep.subr.mxu0 0.0
    %689 = vmatpush1.msra.mxu0 %v68
    %690 = vmatprep.subr.mxu0 0.0
    %691 = vmatpush1.msra.mxu0 %v67
    %692 = vmatprep.subr.mxu0 0.0
    %693 = vmatpush1.msra.mxu0 %v66
    %694 = vmatprep.subr.mxu0 0.0
    %695 = vmatpush2.msra.mxu0 0.0
    %696 = vmatprep.subr.mxu0 0.0
    %697 = vmatpush2.msra.mxu0 0.0
    %698 = vmatprep.subr.mxu0 0.0
    %699 = vmatpush2.msra.mxu0 0.0
    %700 = vmatprep.subr.mxu0 0.0
    %701 = vmatpush2.msra.mxu0 0.0
    %702 = vmatprep.subr.mxu0 0.0
    %703 = vmatpush2.msra.mxu0 0.0
    %704 = vmatprep.subr.mxu0 0.0
    %705 = vmatpush2.msra.mxu0 0.0
    %706 = vmatprep.subr.mxu0 0.0
    %707 = vmatpush2.msra.mxu0 0.0
    %708 = vmatprep.subr.mxu0 0.0
    %709 = vmatpush2.msra.mxu0 0.0
    %710 = vmatprep.subr.mxu0 0.0
    %711 = vmatpush2.msra.mxu0 0.0
    %712 = vmatprep.subr.mxu0 0.0
    %713 = vmatpush2.msra.mxu0 0.0
    %714 = vmatprep.subr.mxu0 0.0
    %715 = vmatpush2.msra.mxu0 0.0
    %716 = vmatprep.subr.mxu0 0.0
    %717 = vmatpush2.msra.mxu0 0.0
    %718 = vmatprep.subr.mxu0 0.0
    %719 = vmatpush2.msra.mxu0 0.0
    %720 = vmatprep.subr.mxu0 0.0
    %721 = vmatpush2.msra.mxu0 0.0
    %722 = vmatprep.subr.mxu0 0.0
    %723 = vmatpush2.msra.mxu0 0.0
    %724 = vmatprep.subr.mxu0 0.0
    %725 = vmatpush2.msra.mxu0 0.0
    %726 = vmatprep.mubr.f32.mxu0 0.0
    %727 = vmatmul.mubr.f32.gmra.mxu0 %v660
    %v728 = vpop.f32.mrf.mxu0
    %v729 = vadd.f32 0.0, %v728
    %v730 = vpop.f32.mrf.mxu0
    %731 = vdwg.mxu0
    %732 = vrot.lane.b32.xlu0 %v658, 32
    %v733 = vpop.permute.xlu0 %732
    %735 = vst.msk [vmem:[#allocation8 + $0x8] sm:$0xff] %vm331, %v733
    %v736 = vsel %vm228, %v729, -inf
    %737 = vmax.xlane.f32.xlu0 %v736
    %v738 = vpop.xlane.xlu0 %737
    %vm739 = vcmp.eq.f32.partialorder %v729, %v738
    %v740 = vsel %vm739, %v234, 16
    %v741 = vsel %vm228, %v740, 2147483647
    %v742 = vand.u32 %v741, 65535
    %v743 = vshra.s32 %v741, 16
    %v744 = vcvt.s32.f32 %v742
    %v745 = vcvt.s32.f32 %v743
    %746 = vmin.xlane.f32.xlu0 %v745
    %v747 = vpop.xlane.xlu0 %746
    %vm748 = vcmp.eq.f32.partialorder %v745, %v747
    %v749 = vsel %vm748, %v744, inf
    %750 = vmin.xlane.f32.xlu0 %v749
    %v751 = vpop.xlane.xlu0 %750
    %v752 = vcvt.f32.s32 %v751
    %v753 = vcvt.f32.s32 %v747
    %v754 = vshll.u32 %v753, 16
    %v755 = vadd.s32 %v754, %v752
    %vm756 = vcmask 48168
    %757 = vst.msk [vmem:[#allocation9] sm:$0xff] %vm756, %v755
    %v758 = vadd.f32 %v147, %v729
    %v759 = vtanh.pop %v758
    %v761 = vsel %vm76, %v759, 0
    %763 = vmatprep.subr.mxu0 0.0
    %764 = vmatpush1.msra.mxu0 0.0
    %765 = vmatprep.subr.mxu0 0.0
    %766 = vmatpush1.msra.mxu0 0.0
    %767 = vmatprep.subr.mxu0 0.0
    %768 = vmatpush1.msra.mxu0 0.0
    %769 = vmatprep.subr.mxu0 0.0
    %770 = vmatpush1.msra.mxu0 0.0
    %771 = vmatprep.subr.mxu0 0.0
    %772 = vmatpush1.msra.mxu0 0.0
    %773 = vmatprep.subr.mxu0 0.0
    %774 = vmatpush1.msra.mxu0 0.0
    %775 = vmatprep.subr.mxu0 0.0
    %776 = vmatpush1.msra.mxu0 0.0
    %777 = vmatprep.subr.mxu0 0.0
    %778 = vmatpush1.msra.mxu0 0.0
    %779 = vmatprep.subr.mxu0 0.0
    %780 = vmatpush1.msra.mxu0 0.0
    %781 = vmatprep.subr.mxu0 0.0
    %782 = vmatpush1.msra.mxu0 0.0
    %783 = vmatprep.subr.mxu0 0.0
    %784 = vmatpush1.msra.mxu0 0.0
    %785 = vmatprep.subr.mxu0 0.0
    %786 = vmatpush1.msra.mxu0 0.0
    %787 = vmatprep.subr.mxu0 0.0
    %788 = vmatpush1.msra.mxu0 %v69
    %789 = vmatprep.subr.mxu0 0.0
    %790 = vmatpush1.msra.mxu0 %v68
    %791 = vmatprep.subr.mxu0 0.0
    %792 = vmatpush1.msra.mxu0 %v67
    %793 = vmatprep.subr.mxu0 0.0
    %794 = vmatpush1.msra.mxu0 %v66
    %795 = vmatprep.subr.mxu0 0.0
    %796 = vmatpush2.msra.mxu0 0.0
    %797 = vmatprep.subr.mxu0 0.0
    %798 = vmatpush2.msra.mxu0 0.0
    %799 = vmatprep.subr.mxu0 0.0
    %800 = vmatpush2.msra.mxu0 0.0
    %801 = vmatprep.subr.mxu0 0.0
    %802 = vmatpush2.msra.mxu0 0.0
    %803 = vmatprep.subr.mxu0 0.0
    %804 = vmatpush2.msra.mxu0 0.0
    %805 = vmatprep.subr.mxu0 0.0
    %806 = vmatpush2.msra.mxu0 0.0
    %807 = vmatprep.subr.mxu0 0.0
    %808 = vmatpush2.msra.mxu0 0.0
    %809 = vmatprep.subr.mxu0 0.0
    %810 = vmatpush2.msra.mxu0 0.0
    %811 = vmatprep.subr.mxu0 0.0
    %812 = vmatpush2.msra.mxu0 0.0
    %813 = vmatprep.subr.mxu0 0.0
    %814 = vmatpush2.msra.mxu0 0.0
    %815 = vmatprep.subr.mxu0 0.0
    %816 = vmatpush2.msra.mxu0 0.0
    %817 = vmatprep.subr.mxu0 0.0
    %818 = vmatpush2.msra.mxu0 0.0
    %819 = vmatprep.subr.mxu0 0.0
    %820 = vmatpush2.msra.mxu0 0.0
    %821 = vmatprep.subr.mxu0 0.0
    %822 = vmatpush2.msra.mxu0 0.0
    %823 = vmatprep.subr.mxu0 0.0
    %824 = vmatpush2.msra.mxu0 0.0
    %825 = vmatprep.subr.mxu0 0.0
    %826 = vmatpush2.msra.mxu0 0.0
    %827 = vmatprep.mubr.f32.mxu0 0.0
    %828 = vmatmul.mubr.f32.gmra.mxu0 %v761
    %v829 = vpop.f32.mrf.mxu0
    %v830 = vadd.f32 0.0, %v829
    %v831 = vpop.f32.mrf.mxu0
    %832 = vdwg.mxu0
    %833 = vrot.lane.b32.xlu0 %v759, 64
    %v834 = vpop.permute.xlu0 %833
    %836 = vst.msk [vmem:[#allocation8 + $0x8] sm:$0xff] %vm433, %v834
    %v837 = vsel %vm228, %v830, -inf
    %838 = vmax.xlane.f32.xlu0 %v837
    %v839 = vpop.xlane.xlu0 %838
    %vm840 = vcmp.eq.f32.partialorder %v830, %v839
    %v841 = vsel %vm840, %v234, 16
    %v842 = vsel %vm228, %v841, 2147483647
    %v843 = vand.u32 %v842, 65535
    %v844 = vshra.s32 %v842, 16
    %v845 = vcvt.s32.f32 %v843
    %v846 = vcvt.s32.f32 %v844
    %847 = vmin.xlane.f32.xlu0 %v846
    %v848 = vpop.xlane.xlu0 %847
    %vm849 = vcmp.eq.f32.partialorder %v846, %v848
    %v850 = vsel %vm849, %v845, inf
    %851 = vmin.xlane.f32.xlu0 %v850
    %v852 = vpop.xlane.xlu0 %851
    %v853 = vcvt.f32.s32 %v852
    %v854 = vcvt.f32.s32 %v848
    %v855 = vshll.u32 %v854, 16
    %v856 = vadd.s32 %v855, %v853
    %vm857 = vcmask 56368
    %858 = vst.msk [vmem:[#allocation9] sm:$0xff] %vm857, %v856
    %v859 = vadd.f32 %v147, %v830
    %v860 = vtanh.pop %v859
    %v862 = vsel %vm76, %v860, 0
    %864 = vmatprep.subr.mxu0 0.0
    %865 = vmatpush1.msra.mxu0 0.0
    %866 = vmatprep.subr.mxu0 0.0
    %867 = vmatpush1.msra.mxu0 0.0
    %868 = vmatprep.subr.mxu0 0.0
    %869 = vmatpush1.msra.mxu0 0.0
    %870 = vmatprep.subr.mxu0 0.0
    %871 = vmatpush1.msra.mxu0 0.0
    %872 = vmatprep.subr.mxu0 0.0
    %873 = vmatpush1.msra.mxu0 0.0
    %874 = vmatprep.subr.mxu0 0.0
    %875 = vmatpush1.msra.mxu0 0.0
    %876 = vmatprep.subr.mxu0 0.0
    %877 = vmatpush1.msra.mxu0 0.0
    %878 = vmatprep.subr.mxu0 0.0
    %879 = vmatpush1.msra.mxu0 0.0
    %880 = vmatprep.subr.mxu0 0.0
    %881 = vmatpush1.msra.mxu0 0.0
    %882 = vmatprep.subr.mxu0 0.0
    %883 = vmatpush1.msra.mxu0 0.0
    %884 = vmatprep.subr.mxu0 0.0
    %885 = vmatpush1.msra.mxu0 0.0
    %886 = vmatprep.subr.mxu0 0.0
    %887 = vmatpush1.msra.mxu0 0.0
    %888 = vmatprep.subr.mxu0 0.0
    %889 = vmatpush1.msra.mxu0 %v69
    %890 = vmatprep.subr.mxu0 0.0
    %891 = vmatpush1.msra.mxu0 %v68
    %892 = vmatprep.subr.mxu0 0.0
    %893 = vmatpush1.msra.mxu0 %v67
    %894 = vmatprep.subr.mxu0 0.0
    %895 = vmatpush1.msra.mxu0 %v66
    %896 = vmatprep.subr.mxu0 0.0
    %897 = vmatpush2.msra.mxu0 0.0
    %898 = vmatprep.subr.mxu0 0.0
    %899 = vmatpush2.msra.mxu0 0.0
    %900 = vmatprep.subr.mxu0 0.0
    %901 = vmatpush2.msra.mxu0 0.0
    %902 = vmatprep.subr.mxu0 0.0
    %903 = vmatpush2.msra.mxu0 0.0
    %904 = vmatprep.subr.mxu0 0.0
    %905 = vmatpush2.msra.mxu0 0.0
    %906 = vmatprep.subr.mxu0 0.0
    %907 = vmatpush2.msra.mxu0 0.0
    %908 = vmatprep.subr.mxu0 0.0
    %909 = vmatpush2.msra.mxu0 0.0
    %910 = vmatprep.subr.mxu0 0.0
    %911 = vmatpush2.msra.mxu0 0.0
    %912 = vmatprep.subr.mxu0 0.0
    %913 = vmatpush2.msra.mxu0 0.0
    %914 = vmatprep.subr.mxu0 0.0
    %915 = vmatpush2.msra.mxu0 0.0
    %916 = vmatprep.subr.mxu0 0.0
    %917 = vmatpush2.msra.mxu0 0.0
    %918 = vmatprep.subr.mxu0 0.0
    %919 = vmatpush2.msra.mxu0 0.0
    %920 = vmatprep.subr.mxu0 0.0
    %921 = vmatpush2.msra.mxu0 0.0
    %922 = vmatprep.subr.mxu0 0.0
    %923 = vmatpush2.msra.mxu0 0.0
    %924 = vmatprep.subr.mxu0 0.0
    %925 = vmatpush2.msra.mxu0 0.0
    %926 = vmatprep.subr.mxu0 0.0
    %927 = vmatpush2.msra.mxu0 0.0
    %928 = vmatprep.mubr.f32.mxu0 0.0
    %929 = vmatmul.mubr.f32.gmra.mxu0 %v862
    %v930 = vpop.f32.mrf.mxu0
    %v931 = vadd.f32 0.0, %v930
    %v932 = vpop.f32.mrf.mxu0
    %933 = vdwg.mxu0
    %934 = vrot.lane.b32.xlu0 %v860, 96
    %v935 = vpop.permute.xlu0 %934
    %937 = vst.msk [vmem:[#allocation8 + $0x8] sm:$0xff] %vm535, %v935
    %v938 = vsel %vm228, %v931, -inf
    %939 = vmax.xlane.f32.xlu0 %v938
    %v940 = vpop.xlane.xlu0 %939
    %vm941 = vcmp.eq.f32.partialorder %v931, %v940
    %v942 = vsel %vm941, %v234, 16
    %v943 = vsel %vm228, %v942, 2147483647
    %v944 = vand.u32 %v943, 65535
    %v945 = vshra.s32 %v943, 16
    %v946 = vcvt.s32.f32 %v944
    %v947 = vcvt.s32.f32 %v945
    %948 = vmin.xlane.f32.xlu0 %v947
    %v949 = vpop.xlane.xlu0 %948
    %vm950 = vcmp.eq.f32.partialorder %v947, %v949
    %v951 = vsel %vm950, %v946, inf
    %952 = vmin.xlane.f32.xlu0 %v951
    %v953 = vpop.xlane.xlu0 %952
    %v954 = vcvt.f32.s32 %v953
    %v955 = vcvt.f32.s32 %v949
    %v956 = vshll.u32 %v955, 16
    %v957 = vadd.s32 %v956, %v954
    %vm958 = vcmask 64568
    %959 = vst.msk [vmem:[#allocation9] sm:$0xff] %vm958, %v957
    // Predicated region
    $region30: #{tpu_custom_call.1} parent=1 // pred_check
      _
    $region31: #{tpu_custom_call.1} parent=1 // pred_check_branch
      %961 = sbr.rel (0) target = $region33
    $region32: #{tpu_custom_call.1} parent=1 // pred_region
      %s963 = ssub.s32 256, 256
      %964 = vsyncadd [#allocation4], %s963
      %s966 = sshll.u32 [#allocation8], 4
      %s967 = int_to_ptr.vmem [resolvable:$true] %s966
      %969 = dma.vmem_to_hbm [thread:$0]  %s967, 256, %s4, [#allocation4]
    $region33: #{tpu_custom_call.1} parent=1 // pred_fallthru
      _
    // Predicated region
    $region34: #{tpu_custom_call.1} parent=1 // pred_check
      _
    $region35: #{tpu_custom_call.1} parent=1 // pred_check_branch
      %971 = sbr.rel (0) target = $region37
    $region36: #{tpu_custom_call.1} parent=1 // pred_region
      %s973 = ssub.s32 128, 128
      %974 = vsyncadd [#allocation10], %s973
      %s976 = sshll.u32 [#allocation9], 4
      %s977 = int_to_ptr.vmem [resolvable:$true] %s976
      %979 = dma.vmem_to_hbm [thread:$0]  %s977, 128, %s5, [#allocation10]
    $region37: #{tpu_custom_call.1} parent=1 // pred_fallthru
      _
    // Predicated region
    $region38: #{tpu_custom_call.1} parent=1 // pred_check
      _
    $region39: #{tpu_custom_call.1} parent=1 // pred_check_branch
      %981 = sbr.rel (0) target = $region41
    $region40: #{tpu_custom_call.1} parent=1 // pred_region
      %982 = dma.done [#allocation4], 256
    $region41: #{tpu_custom_call.1} parent=1 // pred_fallthru
      _
    // Predicated region
    $region42: #{tpu_custom_call.1} parent=1 // pred_check
      _
    $region43: #{tpu_custom_call.1} parent=1 // pred_check_branch
      %984 = sbr.rel (0) target = $region45
    $region44: #{tpu_custom_call.1} parent=1 // pred_region
      %985 = dma.done [#allocation10], 128
    $region45: #{tpu_custom_call.1} parent=1 // pred_fallthru
      _
    %986 = vsyncpa [#allocation3], 1
    %987 = vsyncpa [#allocation6], 1
    %988 = vsyncpa [#allocation4], 1
    %989 = vsyncpa [#allocation10], 1

</llo_original>
